<compile_context>
chip_gen: v6e
topology: v6e:2x2x1
jax: 0.10.0
libtpu: 0.0.40
codegen_flags: <defaults>
</compile_context>

<pallas_src>
import functools

import jax
import jax.numpy as jnp
from jax.experimental import pallas as pl
from jax.experimental.pallas import tpu as pltpu


def _basic_block_kernel(x_ref, w1_ref, b1_ref, w2_ref, b2_ref, out_ref, p_ref,
                        *, height, width):
    """Fused conv3x3 -> BN -> ReLU -> conv3x3 -> BN -> +identity -> ReLU.

    One grid step = one batch element, channel-major / lane-dense layout:
      x_ref  : (Cp, HWp)   input, also the identity branch (Cp % 8 == 0,
                           HWp % 128 == 0 -- padded in the wrapper)
      w*_ref : (Cp, 9*Cp)  im2col-folded conv weights with BN scale folded in,
                           stored in compute_dtype (bf16 by default)
      b*_ref : (Cp, 1)     folded BN bias (float32)
      out_ref: (Cp, HWp)
      p_ref  : (9*Cp, HWp) VMEM scratch: im2col matrix in compute_dtype,
                           fully overwritten on every fill (never zero-filled)
    """
    C, HWp = out_ref.shape
    H, W = height, width
    p_dtype = p_ref.dtype

    # ---- edge-validity masks: built ONCE, reused by both im2col fills ------
    col = jax.lax.broadcasted_iota(jnp.int32, (1, HWp), 1)    # flat position
    if W & (W - 1) == 0:                    # power-of-two width: cheap AND
        ww = col & (W - 1)
    else:                                   # general width: exact f32 math
        colf = col.astype(jnp.float32)      # (exact while H*W < 2**24)
        ww = (colf - jnp.floor(colf / W) * W).astype(jnp.int32)
    left_ok = ww >= 1                       # taps with dw = -1
    right_ok = ww <= W - 2                  # taps with dw = +1
    top_ok = col >= W                       # taps with dh = -1
    bot_ok = col < (H - 1) * W              # taps with dh = +1

    taps = [(dh, dw) for dh in (-1, 0, 1) for dw in (-1, 0, 1)]
    tap_masks = []
    for dh, dw in taps:
        m = None
        if dh == -1:
            m = top_ok
        elif dh == 1:
            m = bot_ok
        if dw == -1:
            m = left_ok if m is None else m & left_ok
        elif dw == 1:
            m = right_ok if m is None else m & right_ok
        tap_masks.append(m)

    def fill_im2col(src):
        """Stage the (9*Cp, HWp) im2col matrix of a 3x3/stride-1/pad-1 conv.

        `src` is a float32 (Cp, HWp) value.  Each tap = full-width roll (XLU)
        + hoisted mask + one lane-dense, sublane-aligned, unmasked store.
        """
        for t, (dh, dw) in enumerate(taps):
            delta = dh * W + dw                        # flat-index shift
            if delta == 0:
                rolled = src
            else:
                # rolled[:, s] == src[:, s + delta]    (jnp.roll semantics)
                rolled = pltpu.roll(src, shift=(-delta) % HWp, axis=1)
            m = tap_masks[t]
            if m is not None:
                rolled = jnp.where(m, rolled, 0.0)
            p_ref[t * C:(t + 1) * C, :] = rolled.astype(p_dtype)

    x = x_ref[...].astype(jnp.float32)

    # ---- conv1 (+ folded BN1) + ReLU: one MXU matmul with K = 9*Cp ---------
    fill_im2col(x)
    acc1 = jnp.dot(w1_ref[...], p_ref[...], preferred_element_type=jnp.float32)
    y1 = jnp.maximum(acc1 + b1_ref[...], 0.0)                  # (Cp, HWp) f32

    # ---- conv2 (+ folded BN2) ----------------------------------------------
    # TODO(synk): on v6e/v7x rolling/masking y1 in bf16 (staged in a bf16
    #             scratch) would halve fill-2 traffic; kept f32 here so all
    #             elementwise math stays f32 (v5e has no bf16 VPU).
    fill_im2col(y1)
    acc2 = jnp.dot(w2_ref[...], p_ref[...], preferred_element_type=jnp.float32)

    # ---- residual add + ReLU; full-block lane-dense store ------------------
    out = acc2 + b2_ref[...] + x
    out_ref[...] = jnp.maximum(out, 0.0).astype(out_ref.dtype)


def basic_block(x_nchw, w1_oihw, bn1, w2_oihw, bn2, eps=1e-5,
                compute_dtype=jnp.bfloat16, out_dtype=None):
    """BasicBlock forward (stride=1, downsample=None). Input/output NCHW.

    MXU operands (folded weights + im2col scratch) use `compute_dtype`
    (default bfloat16, the native MXU path); accumulation and elementwise
    math stay float32.  Pass compute_dtype=jnp.float32 for tight numerics.
    `out_dtype` defaults to the input dtype (set bf16 if the consumer allows).
    """
    N, C, H, W = x_nchw.shape
    Cout = w1_oihw.shape[0]
    assert Cout == C and w2_oihw.shape == (C, C, 3, 3), \
        "downsample=None / stride=1 requires inplanes == planes"
    assert H * W < (1 << 24), "flat spatial index must stay f32-exact"
    if out_dtype is None:
        out_dtype = x_nchw.dtype

    HW = H * W
    Cp = ((C + 7) // 8) * 8                  # sublane-aligned channel count
    HWp = ((HW + 127) // 128) * 128          # lane-aligned flattened spatial

    def fold(w_oihw, bn):
        gamma, beta, mean, var = bn
        scale = gamma / jnp.sqrt(var + eps)                      # (C,)
        bias = beta - mean * scale                               # (C,)
        # OIHW -> (Cout, kh, kw, Cin), fold BN scale, zero-pad to (Cp,3,3,Cp),
        # flatten to (Cp, 9*Cp); K ordered (kh, kw, ci) to match p_ref rows.
        w = jnp.transpose(w_oihw, (0, 2, 3, 1)) * scale[:, None, None, None]
        w = jnp.pad(w, ((0, Cp - C), (0, 0), (0, 0), (0, Cp - C)))
        wmat = w.reshape(Cp, 9 * Cp).astype(compute_dtype)
        b = jnp.pad(bias, (0, Cp - C)).reshape(Cp, 1).astype(jnp.float32)
        return wmat, b

    w1m, b1 = fold(w1_oihw, bn1)
    w2m, b2 = fold(w2_oihw, bn2)

    # NCHW -> (N, C, H*W): pure reshape (no transpose).  Zero-pad channels to
    # a multiple of 8 and flattened spatial to a multiple of 128 so every
    # kernel store is tile-aligned and unmasked.
    x_flat = x_nchw.reshape(N, C, HW)
    if Cp != C or HWp != HW:
        x_flat = jnp.pad(x_flat, ((0, 0), (0, Cp - C), (0, HWp - HW)))

    itemsize_c = jnp.dtype(compute_dtype).itemsize
    flops = 2 * (2 * (9 * C) * C * HW) * N             # two 3x3 convs
    bytes_accessed = (N * Cp * HWp * x_flat.dtype.itemsize
                      + N * Cp * HWp * jnp.dtype(out_dtype).itemsize
                      + 2 * Cp * 9 * Cp * itemsize_c
                      + 2 * Cp * 4)

    # VMEM budget: double-buffered x/out blocks + im2col scratch + weights.
    vmem_need = (2 * Cp * HWp * x_flat.dtype.itemsize
                 + 2 * Cp * HWp * jnp.dtype(out_dtype).itemsize
                 + 9 * Cp * HWp * itemsize_c
                 + 2 * 2 * Cp * 9 * Cp * itemsize_c
                 + 4 * Cp * 8)
    vmem_limit = int(min(max(2 * vmem_need, 32 * 1024 * 1024),
                         100 * 1024 * 1024))

    kernel = functools.partial(_basic_block_kernel, height=H, width=W)

    out_flat = pl.pallas_call(
        kernel,
        out_shape=jax.ShapeDtypeStruct((N, Cp, HWp), out_dtype),
        grid_spec=pltpu.PrefetchScalarGridSpec(
            num_scalar_prefetch=0,
            grid=(N,),
            in_specs=[
                pl.BlockSpec((None, Cp, HWp), lambda n: (n, 0, 0)),   # x
                pl.BlockSpec((Cp, 9 * Cp), lambda n: (0, 0)),         # w1
                pl.BlockSpec((Cp, 1), lambda n: (0, 0)),              # b1
                pl.BlockSpec((Cp, 9 * Cp), lambda n: (0, 0)),         # w2
                pl.BlockSpec((Cp, 1), lambda n: (0, 0)),              # b2
            ],
            out_specs=pl.BlockSpec((None, Cp, HWp), lambda n: (n, 0, 0)),
            scratch_shapes=[pltpu.VMEM((9 * Cp, HWp), compute_dtype)],
        ),
        compiler_params=pltpu.CompilerParams(
            dimension_semantics=("parallel",),
            vmem_limit_bytes=vmem_limit,
        ),
        cost_estimate=pl.CostEstimate(
            flops=int(flops), transcendentals=0,
            bytes_accessed=int(bytes_accessed)),
    )(x_flat, w1m, b1, w2m, b2)

    return out_flat[:, :C, :HW].reshape(N, C, H, W)


def basic_block_ref(x, w1, bn1, w2, bn2, eps=1e-5):
    """Pure-JAX reference (NCHW, matches PyTorch eval-mode semantics)."""
    def conv(x, w):
        return jax.lax.conv_general_dilated(
            x, w, window_strides=(1, 1), padding=((1, 1), (1, 1)),
            dimension_numbers=("NCHW", "OIHW", "NCHW"))

    def bn(x, p):
        g, b, m, v = p
        inv = 1.0 / jnp.sqrt(v + eps)
        return (x - m[None, :, None, None]) * (g * inv)[None, :, None, None] \
               + b[None, :, None, None]

    out = jax.nn.relu(bn(conv(x, w1), bn1))
    out = bn(conv(out, w2), bn2)
    return jax.nn.relu(out + x)


if __name__ == "__main__":
    key = jax.random.PRNGKey(0)
    keys = jax.random.split(key, 11)

    N, C, H, W = 2, 4, 16, 16     # inplanes == planes == 4, stride=1
    planes = C

    x = jax.random.normal(keys[0], (N, C, H, W), jnp.float32)

    # conv weights, PyTorch layout (Cout, Cin, 3, 3), bias=False
    w1 = 0.1 * jax.random.normal(keys[1], (planes, C, 3, 3), jnp.float32)
    w2 = 0.1 * jax.random.normal(keys[2], (planes, planes, 3, 3), jnp.float32)

    # BatchNorm params: (gamma, beta, running_mean, running_var)
    bn1 = (1.0 + 0.1 * jax.random.normal(keys[3], (planes,), jnp.float32),
           0.1 * jax.random.normal(keys[4], (planes,), jnp.float32),
           0.1 * jax.random.normal(keys[5], (planes,), jnp.float32),
           0.5 + jnp.abs(jax.random.normal(keys[6], (planes,), jnp.float32)))
    bn2 = (1.0 + 0.1 * jax.random.normal(keys[7], (planes,), jnp.float32),
           0.1 * jax.random.normal(keys[8], (planes,), jnp.float32),
           0.1 * jax.random.normal(keys[9], (planes,), jnp.float32),
           0.5 + jnp.abs(jax.random.normal(keys[10], (planes,), jnp.float32)))

    ref = jax.block_until_ready(basic_block_ref(x, w1, bn1, w2, bn2))

    # float32 MXU-operand path: tight check against the reference.
    out_f32 = jax.block_until_ready(
        basic_block(x, w1, bn1, w2, bn2, compute_dtype=jnp.float32))
    assert out_f32.shape == (N, C, H, W)
    err_f32 = float(jnp.max(jnp.abs(out_f32 - ref)))
    assert jnp.allclose(out_f32, ref, atol=2e-4, rtol=2e-4), \
        f"f32 path: max abs err = {err_f32}"

    # default bf16 MXU-operand path (f32 accumulation): looser tolerance.
    out_bf16 = jax.block_until_ready(basic_block(x, w1, bn1, w2, bn2))
    assert out_bf16.shape == (N, C, H, W)
    err_bf16 = float(jnp.max(jnp.abs(out_bf16 - ref)))
    assert jnp.allclose(out_bf16, ref, atol=5e-2, rtol=5e-2), \
        f"bf16 path: max abs err = {err_bf16}"

    print("KERNEL_OK")
</pallas_src>

<mosaic_0001>
module attributes {stable_mosaic.version = 11 : i64} {
  func.func @_basic_block_kernel(%arg0: i32, %arg1: memref<1x8x256xf32, #tpu.memory_space<vmem>>, %arg2: memref<8x72xf32, #tpu.memory_space<vmem>>, %arg3: memref<8x1xf32, #tpu.memory_space<vmem>>, %arg4: memref<8x72xf32, #tpu.memory_space<vmem>>, %arg5: memref<8x1xf32, #tpu.memory_space<vmem>>, %arg6: memref<1x8x256xf32, #tpu.memory_space<vmem>>, %arg7: memref<72x256xf32, #tpu.memory_space<vmem>>) attributes {dimension_semantics = [#tpu.dimension_semantics<parallel>], iteration_bounds = array<i64: 2>, scalar_prefetch = 0 : i64, scratch_operands = 1 : i64, tpu.core_type = #tpu.core_type<tc>, window_params = [{transform_indices = @transform_0, window_bounds = array<i64: 1, 8, 256>}, {pipeline_mode = #tpu.pipeline_mode<synchronous>, transform_indices = @transform_1, window_bounds = array<i64: 8, 72>}, {pipeline_mode = #tpu.pipeline_mode<synchronous>, transform_indices = @transform_2, window_bounds = array<i64: 8, 1>}, {pipeline_mode = #tpu.pipeline_mode<synchronous>, transform_indices = @transform_3, window_bounds = array<i64: 8, 72>}, {pipeline_mode = #tpu.pipeline_mode<synchronous>, transform_indices = @transform_4, window_bounds = array<i64: 8, 1>}, {transform_indices = @transform_5, window_bounds = array<i64: 1, 8, 256>}]} {
    %0 = tpu.iota {dimensions = array<i32: 1>} : vector<1x256xi32>
    %c15_i32 = arith.constant 15 : i32
    %1 = vector.broadcast %c15_i32 : i32 to vector<1x256xi32>
    %2 = arith.andi %0, %1 : vector<1x256xi32>
    %c1_i32 = arith.constant 1 : i32
    %3 = vector.broadcast %c1_i32 : i32 to vector<1x256xi32>
    %4 = arith.cmpi sge, %2, %3 : vector<1x256xi32>
    %c14_i32 = arith.constant 14 : i32
    %5 = vector.broadcast %c14_i32 : i32 to vector<1x256xi32>
    %6 = arith.cmpi sle, %2, %5 : vector<1x256xi32>
    %c16_i32 = arith.constant 16 : i32
    %7 = vector.broadcast %c16_i32 : i32 to vector<1x256xi32>
    %8 = arith.cmpi sge, %0, %7 : vector<1x256xi32>
    %c240_i32 = arith.constant 240 : i32
    %9 = vector.broadcast %c240_i32 : i32 to vector<1x256xi32>
    %10 = arith.cmpi slt, %0, %9 : vector<1x256xi32>
    %11 = arith.andi %8, %4 : vector<1x256xi1>
    %12 = arith.andi %8, %6 : vector<1x256xi1>
    %13 = arith.andi %10, %4 : vector<1x256xi1>
    %14 = arith.andi %10, %6 : vector<1x256xi1>
    %c0 = arith.constant 0 : index
    %c0_0 = arith.constant 0 : index
    %c0_1 = arith.constant 0 : index
    %15 = vector.load %arg1[%c0, %c0_0, %c0_1] : memref<1x8x256xf32, #tpu.memory_space<vmem>>, vector<1x8x256xf32>
    %16 = vector.shape_cast %15 : vector<1x8x256xf32> to vector<8x256xf32>
    %c17_i32 = arith.constant 17 : i32
    %17 = tpu.dynamic_rotate %16 by %c17_i32 dim 1 : vector<8x256xf32>, i32 -> vector<8x256xf32>
    %cst = arith.constant 0.000000e+00 : f32
    %18 = vector.shape_cast %11 : vector<1x256xi1> to vector<1x256xi1>
    %19 = vector.broadcast %18 : vector<1x256xi1> to vector<8x256xi1>
    %20 = vector.broadcast %cst : f32 to vector<8x256xf32>
    %21 = arith.select %19, %17, %20 : vector<8x256xi1>, vector<8x256xf32>
    %c0_2 = arith.constant 0 : index
    %c0_3 = arith.constant 0 : index
    %22 = vector.load %arg7[%c0_2, %c0_3] : memref<72x256xf32, #tpu.memory_space<vmem>>, vector<8x256xf32>
    tpu.vector_store %arg7[%c0_2, %c0_3], %21 {strides = array<i32>} : memref<72x256xf32, #tpu.memory_space<vmem>>, vector<8x256xf32>,
    %c16_i32_4 = arith.constant 16 : i32
    %23 = tpu.dynamic_rotate %16 by %c16_i32_4 dim 1 : vector<8x256xf32>, i32 -> vector<8x256xf32>
    %cst_5 = arith.constant 0.000000e+00 : f32
    %24 = vector.shape_cast %8 : vector<1x256xi1> to vector<1x256xi1>
    %25 = vector.broadcast %24 : vector<1x256xi1> to vector<8x256xi1>
    %26 = vector.broadcast %cst_5 : f32 to vector<8x256xf32>
    %27 = arith.select %25, %23, %26 : vector<8x256xi1>, vector<8x256xf32>
    %c8 = arith.constant 8 : index
    %c0_6 = arith.constant 0 : index
    %28 = vector.load %arg7[%c8, %c0_6] : memref<72x256xf32, #tpu.memory_space<vmem>>, vector<8x256xf32>
    tpu.vector_store %arg7[%c8, %c0_6], %27 {strides = array<i32>} : memref<72x256xf32, #tpu.memory_space<vmem>>, vector<8x256xf32>,
    %c15_i32_7 = arith.constant 15 : i32
    %29 = tpu.dynamic_rotate %16 by %c15_i32_7 dim 1 : vector<8x256xf32>, i32 -> vector<8x256xf32>
    %cst_8 = arith.constant 0.000000e+00 : f32
    %30 = vector.shape_cast %12 : vector<1x256xi1> to vector<1x256xi1>
    %31 = vector.broadcast %30 : vector<1x256xi1> to vector<8x256xi1>
    %32 = vector.broadcast %cst_8 : f32 to vector<8x256xf32>
    %33 = arith.select %31, %29, %32 : vector<8x256xi1>, vector<8x256xf32>
    %c16 = arith.constant 16 : index
    %c0_9 = arith.constant 0 : index
    %34 = vector.load %arg7[%c16, %c0_9] : memref<72x256xf32, #tpu.memory_space<vmem>>, vector<8x256xf32>
    tpu.vector_store %arg7[%c16, %c0_9], %33 {strides = array<i32>} : memref<72x256xf32, #tpu.memory_space<vmem>>, vector<8x256xf32>,
    %c1_i32_10 = arith.constant 1 : i32
    %35 = tpu.dynamic_rotate %16 by %c1_i32_10 dim 1 : vector<8x256xf32>, i32 -> vector<8x256xf32>
    %cst_11 = arith.constant 0.000000e+00 : f32
    %36 = vector.shape_cast %4 : vector<1x256xi1> to vector<1x256xi1>
    %37 = vector.broadcast %36 : vector<1x256xi1> to vector<8x256xi1>
    %38 = vector.broadcast %cst_11 : f32 to vector<8x256xf32>
    %39 = arith.select %37, %35, %38 : vector<8x256xi1>, vector<8x256xf32>
    %c24 = arith.constant 24 : index
    %c0_12 = arith.constant 0 : index
    %40 = vector.load %arg7[%c24, %c0_12] : memref<72x256xf32, #tpu.memory_space<vmem>>, vector<8x256xf32>
    tpu.vector_store %arg7[%c24, %c0_12], %39 {strides = array<i32>} : memref<72x256xf32, #tpu.memory_space<vmem>>, vector<8x256xf32>,
    %c32 = arith.constant 32 : index
    %c0_13 = arith.constant 0 : index
    %41 = vector.load %arg7[%c32, %c0_13] : memref<72x256xf32, #tpu.memory_space<vmem>>, vector<8x256xf32>
    tpu.vector_store %arg7[%c32, %c0_13], %16 {strides = array<i32>} : memref<72x256xf32, #tpu.memory_space<vmem>>, vector<8x256xf32>,
    %c255_i32 = arith.constant 255 : i32
    %42 = tpu.dynamic_rotate %16 by %c255_i32 dim 1 : vector<8x256xf32>, i32 -> vector<8x256xf32>
    %cst_14 = arith.constant 0.000000e+00 : f32
    %43 = vector.shape_cast %6 : vector<1x256xi1> to vector<1x256xi1>
    %44 = vector.broadcast %43 : vector<1x256xi1> to vector<8x256xi1>
    %45 = vector.broadcast %cst_14 : f32 to vector<8x256xf32>
    %46 = arith.select %44, %42, %45 : vector<8x256xi1>, vector<8x256xf32>
    %c40 = arith.constant 40 : index
    %c0_15 = arith.constant 0 : index
    %47 = vector.load %arg7[%c40, %c0_15] : memref<72x256xf32, #tpu.memory_space<vmem>>, vector<8x256xf32>
    tpu.vector_store %arg7[%c40, %c0_15], %46 {strides = array<i32>} : memref<72x256xf32, #tpu.memory_space<vmem>>, vector<8x256xf32>,
    %c241_i32 = arith.constant 241 : i32
    %48 = tpu.dynamic_rotate %16 by %c241_i32 dim 1 : vector<8x256xf32>, i32 -> vector<8x256xf32>
    %cst_16 = arith.constant 0.000000e+00 : f32
    %49 = vector.shape_cast %13 : vector<1x256xi1> to vector<1x256xi1>
    %50 = vector.broadcast %49 : vector<1x256xi1> to vector<8x256xi1>
    %51 = vector.broadcast %cst_16 : f32 to vector<8x256xf32>
    %52 = arith.select %50, %48, %51 : vector<8x256xi1>, vector<8x256xf32>
    %c48 = arith.constant 48 : index
    %c0_17 = arith.constant 0 : index
    %53 = vector.load %arg7[%c48, %c0_17] : memref<72x256xf32, #tpu.memory_space<vmem>>, vector<8x256xf32>
    tpu.vector_store %arg7[%c48, %c0_17], %52 {strides = array<i32>} : memref<72x256xf32, #tpu.memory_space<vmem>>, vector<8x256xf32>,
    %c240_i32_18 = arith.constant 240 : i32
    %54 = tpu.dynamic_rotate %16 by %c240_i32_18 dim 1 : vector<8x256xf32>, i32 -> vector<8x256xf32>
    %cst_19 = arith.constant 0.000000e+00 : f32
    %55 = vector.shape_cast %10 : vector<1x256xi1> to vector<1x256xi1>
    %56 = vector.broadcast %55 : vector<1x256xi1> to vector<8x256xi1>
    %57 = vector.broadcast %cst_19 : f32 to vector<8x256xf32>
    %58 = arith.select %56, %54, %57 : vector<8x256xi1>, vector<8x256xf32>
    %c56 = arith.constant 56 : index
    %c0_20 = arith.constant 0 : index
    %59 = vector.load %arg7[%c56, %c0_20] : memref<72x256xf32, #tpu.memory_space<vmem>>, vector<8x256xf32>
    tpu.vector_store %arg7[%c56, %c0_20], %58 {strides = array<i32>} : memref<72x256xf32, #tpu.memory_space<vmem>>, vector<8x256xf32>,
    %c239_i32 = arith.constant 239 : i32
    %60 = tpu.dynamic_rotate %16 by %c239_i32 dim 1 : vector<8x256xf32>, i32 -> vector<8x256xf32>
    %cst_21 = arith.constant 0.000000e+00 : f32
    %61 = vector.shape_cast %14 : vector<1x256xi1> to vector<1x256xi1>
    %62 = vector.broadcast %61 : vector<1x256xi1> to vector<8x256xi1>
    %63 = vector.broadcast %cst_21 : f32 to vector<8x256xf32>
    %64 = arith.select %62, %60, %63 : vector<8x256xi1>, vector<8x256xf32>
    %c64 = arith.constant 64 : index
    %c0_22 = arith.constant 0 : index
    %65 = vector.load %arg7[%c64, %c0_22] : memref<72x256xf32, #tpu.memory_space<vmem>>, vector<8x256xf32>
    tpu.vector_store %arg7[%c64, %c0_22], %64 {strides = array<i32>} : memref<72x256xf32, #tpu.memory_space<vmem>>, vector<8x256xf32>,
    %c0_23 = arith.constant 0 : index
    %c0_24 = arith.constant 0 : index
    %66 = vector.load %arg2[%c0_23, %c0_24] : memref<8x72xf32, #tpu.memory_space<vmem>>, vector<8x72xf32>
    %c0_25 = arith.constant 0 : index
    %c0_26 = arith.constant 0 : index
    %67 = vector.load %arg7[%c0_25, %c0_26] : memref<72x256xf32, #tpu.memory_space<vmem>>, vector<72x256xf32>
    %cst_27 = arith.constant dense<0.000000e+00> : vector<8x256xf32>
    %68 = tpu.matmul %66, %67, %cst_27 {dimension_numbers = #tpu.dot_dimension_numbers<[1], [0], [0], [1], [0, 0, 1, 1], [], []>} : vector<8x72xf32>, vector<72x256xf32>, vector<8x256xf32> -> vector<8x256xf32>
    %c0_28 = arith.constant 0 : index
    %c0_29 = arith.constant 0 : index
    %69 = vector.load %arg3[%c0_28, %c0_29] : memref<8x1xf32, #tpu.memory_space<vmem>>, vector<8x1xf32>
    %70 = vector.broadcast %69 : vector<8x1xf32> to vector<8x256xf32>
    %71 = arith.addf %68, %70 : vector<8x256xf32>
    %cst_30 = arith.constant 0.000000e+00 : f32
    %72 = vector.broadcast %cst_30 : f32 to vector<8x256xf32>
    %73 = arith.maximumf %71, %72 : vector<8x256xf32>
    %c17_i32_31 = arith.constant 17 : i32
    %74 = tpu.dynamic_rotate %73 by %c17_i32_31 dim 1 : vector<8x256xf32>, i32 -> vector<8x256xf32>
    %cst_32 = arith.constant 0.000000e+00 : f32
    %75 = vector.shape_cast %11 : vector<1x256xi1> to vector<1x256xi1>
    %76 = vector.broadcast %75 : vector<1x256xi1> to vector<8x256xi1>
    %77 = vector.broadcast %cst_32 : f32 to vector<8x256xf32>
    %78 = arith.select %76, %74, %77 : vector<8x256xi1>, vector<8x256xf32>
    %c0_33 = arith.constant 0 : index
    %c0_34 = arith.constant 0 : index
    %79 = vector.load %arg7[%c0_33, %c0_34] : memref<72x256xf32, #tpu.memory_space<vmem>>, vector<8x256xf32>
    tpu.vector_store %arg7[%c0_33, %c0_34], %78 {strides = array<i32>} : memref<72x256xf32, #tpu.memory_space<vmem>>, vector<8x256xf32>,
    %c16_i32_35 = arith.constant 16 : i32
    %80 = tpu.dynamic_rotate %73 by %c16_i32_35 dim 1 : vector<8x256xf32>, i32 -> vector<8x256xf32>
    %cst_36 = arith.constant 0.000000e+00 : f32
    %81 = vector.shape_cast %8 : vector<1x256xi1> to vector<1x256xi1>
    %82 = vector.broadcast %81 : vector<1x256xi1> to vector<8x256xi1>
    %83 = vector.broadcast %cst_36 : f32 to vector<8x256xf32>
    %84 = arith.select %82, %80, %83 : vector<8x256xi1>, vector<8x256xf32>
    %c8_37 = arith.constant 8 : index
    %c0_38 = arith.constant 0 : index
    %85 = vector.load %arg7[%c8_37, %c0_38] : memref<72x256xf32, #tpu.memory_space<vmem>>, vector<8x256xf32>
    tpu.vector_store %arg7[%c8_37, %c0_38], %84 {strides = array<i32>} : memref<72x256xf32, #tpu.memory_space<vmem>>, vector<8x256xf32>,
    %c15_i32_39 = arith.constant 15 : i32
    %86 = tpu.dynamic_rotate %73 by %c15_i32_39 dim 1 : vector<8x256xf32>, i32 -> vector<8x256xf32>
    %cst_40 = arith.constant 0.000000e+00 : f32
    %87 = vector.shape_cast %12 : vector<1x256xi1> to vector<1x256xi1>
    %88 = vector.broadcast %87 : vector<1x256xi1> to vector<8x256xi1>
    %89 = vector.broadcast %cst_40 : f32 to vector<8x256xf32>
    %90 = arith.select %88, %86, %89 : vector<8x256xi1>, vector<8x256xf32>
    %c16_41 = arith.constant 16 : index
    %c0_42 = arith.constant 0 : index
    %91 = vector.load %arg7[%c16_41, %c0_42] : memref<72x256xf32, #tpu.memory_space<vmem>>, vector<8x256xf32>
    tpu.vector_store %arg7[%c16_41, %c0_42], %90 {strides = array<i32>} : memref<72x256xf32, #tpu.memory_space<vmem>>, vector<8x256xf32>,
    %c1_i32_43 = arith.constant 1 : i32
    %92 = tpu.dynamic_rotate %73 by %c1_i32_43 dim 1 : vector<8x256xf32>, i32 -> vector<8x256xf32>
    %cst_44 = arith.constant 0.000000e+00 : f32
    %93 = vector.shape_cast %4 : vector<1x256xi1> to vector<1x256xi1>
    %94 = vector.broadcast %93 : vector<1x256xi1> to vector<8x256xi1>
    %95 = vector.broadcast %cst_44 : f32 to vector<8x256xf32>
    %96 = arith.select %94, %92, %95 : vector<8x256xi1>, vector<8x256xf32>
    %c24_45 = arith.constant 24 : index
    %c0_46 = arith.constant 0 : index
    %97 = vector.load %arg7[%c24_45, %c0_46] : memref<72x256xf32, #tpu.memory_space<vmem>>, vector<8x256xf32>
    tpu.vector_store %arg7[%c24_45, %c0_46], %96 {strides = array<i32>} : memref<72x256xf32, #tpu.memory_space<vmem>>, vector<8x256xf32>,
    %c32_47 = arith.constant 32 : index
    %c0_48 = arith.constant 0 : index
    %98 = vector.load %arg7[%c32_47, %c0_48] : memref<72x256xf32, #tpu.memory_space<vmem>>, vector<8x256xf32>
    tpu.vector_store %arg7[%c32_47, %c0_48], %73 {strides = array<i32>} : memref<72x256xf32, #tpu.memory_space<vmem>>, vector<8x256xf32>,
    %c255_i32_49 = arith.constant 255 : i32
    %99 = tpu.dynamic_rotate %73 by %c255_i32_49 dim 1 : vector<8x256xf32>, i32 -> vector<8x256xf32>
    %cst_50 = arith.constant 0.000000e+00 : f32
    %100 = vector.shape_cast %6 : vector<1x256xi1> to vector<1x256xi1>
    %101 = vector.broadcast %100 : vector<1x256xi1> to vector<8x256xi1>
    %102 = vector.broadcast %cst_50 : f32 to vector<8x256xf32>
    %103 = arith.select %101, %99, %102 : vector<8x256xi1>, vector<8x256xf32>
    %c40_51 = arith.constant 40 : index
    %c0_52 = arith.constant 0 : index
    %104 = vector.load %arg7[%c40_51, %c0_52] : memref<72x256xf32, #tpu.memory_space<vmem>>, vector<8x256xf32>
    tpu.vector_store %arg7[%c40_51, %c0_52], %103 {strides = array<i32>} : memref<72x256xf32, #tpu.memory_space<vmem>>, vector<8x256xf32>,
    %c241_i32_53 = arith.constant 241 : i32
    %105 = tpu.dynamic_rotate %73 by %c241_i32_53 dim 1 : vector<8x256xf32>, i32 -> vector<8x256xf32>
    %cst_54 = arith.constant 0.000000e+00 : f32
    %106 = vector.shape_cast %13 : vector<1x256xi1> to vector<1x256xi1>
    %107 = vector.broadcast %106 : vector<1x256xi1> to vector<8x256xi1>
    %108 = vector.broadcast %cst_54 : f32 to vector<8x256xf32>
    %109 = arith.select %107, %105, %108 : vector<8x256xi1>, vector<8x256xf32>
    %c48_55 = arith.constant 48 : index
    %c0_56 = arith.constant 0 : index
    %110 = vector.load %arg7[%c48_55, %c0_56] : memref<72x256xf32, #tpu.memory_space<vmem>>, vector<8x256xf32>
    tpu.vector_store %arg7[%c48_55, %c0_56], %109 {strides = array<i32>} : memref<72x256xf32, #tpu.memory_space<vmem>>, vector<8x256xf32>,
    %c240_i32_57 = arith.constant 240 : i32
    %111 = tpu.dynamic_rotate %73 by %c240_i32_57 dim 1 : vector<8x256xf32>, i32 -> vector<8x256xf32>
    %cst_58 = arith.constant 0.000000e+00 : f32
    %112 = vector.shape_cast %10 : vector<1x256xi1> to vector<1x256xi1>
    %113 = vector.broadcast %112 : vector<1x256xi1> to vector<8x256xi1>
    %114 = vector.broadcast %cst_58 : f32 to vector<8x256xf32>
    %115 = arith.select %113, %111, %114 : vector<8x256xi1>, vector<8x256xf32>
    %c56_59 = arith.constant 56 : index
    %c0_60 = arith.constant 0 : index
    %116 = vector.load %arg7[%c56_59, %c0_60] : memref<72x256xf32, #tpu.memory_space<vmem>>, vector<8x256xf32>
    tpu.vector_store %arg7[%c56_59, %c0_60], %115 {strides = array<i32>} : memref<72x256xf32, #tpu.memory_space<vmem>>, vector<8x256xf32>,
    %c239_i32_61 = arith.constant 239 : i32
    %117 = tpu.dynamic_rotate %73 by %c239_i32_61 dim 1 : vector<8x256xf32>, i32 -> vector<8x256xf32>
    %cst_62 = arith.constant 0.000000e+00 : f32
    %118 = vector.shape_cast %14 : vector<1x256xi1> to vector<1x256xi1>
    %119 = vector.broadcast %118 : vector<1x256xi1> to vector<8x256xi1>
    %120 = vector.broadcast %cst_62 : f32 to vector<8x256xf32>
    %121 = arith.select %119, %117, %120 : vector<8x256xi1>, vector<8x256xf32>
    %c64_63 = arith.constant 64 : index
    %c0_64 = arith.constant 0 : index
    %122 = vector.load %arg7[%c64_63, %c0_64] : memref<72x256xf32, #tpu.memory_space<vmem>>, vector<8x256xf32>
    tpu.vector_store %arg7[%c64_63, %c0_64], %121 {strides = array<i32>} : memref<72x256xf32, #tpu.memory_space<vmem>>, vector<8x256xf32>,
    %c0_65 = arith.constant 0 : index
    %c0_66 = arith.constant 0 : index
    %123 = vector.load %arg4[%c0_65, %c0_66] : memref<8x72xf32, #tpu.memory_space<vmem>>, vector<8x72xf32>
    %c0_67 = arith.constant 0 : index
    %c0_68 = arith.constant 0 : index
    %124 = vector.load %arg7[%c0_67, %c0_68] : memref<72x256xf32, #tpu.memory_space<vmem>>, vector<72x256xf32>
    %cst_69 = arith.constant dense<0.000000e+00> : vector<8x256xf32>
    %125 = tpu.matmul %123, %124, %cst_69 {dimension_numbers = #tpu.dot_dimension_numbers<[1], [0], [0], [1], [0, 0, 1, 1], [], []>} : vector<8x72xf32>, vector<72x256xf32>, vector<8x256xf32> -> vector<8x256xf32>
    %c0_70 = arith.constant 0 : index
    %c0_71 = arith.constant 0 : index
    %126 = vector.load %arg5[%c0_70, %c0_71] : memref<8x1xf32, #tpu.memory_space<vmem>>, vector<8x1xf32>
    %127 = vector.broadcast %126 : vector<8x1xf32> to vector<8x256xf32>
    %128 = arith.addf %125, %127 : vector<8x256xf32>
    %129 = arith.addf %128, %16 : vector<8x256xf32>
    %cst_72 = arith.constant 0.000000e+00 : f32
    %130 = vector.broadcast %cst_72 : f32 to vector<8x256xf32>
    %131 = arith.maximumf %129, %130 : vector<8x256xf32>
    %c0_73 = arith.constant 0 : index
    %c0_74 = arith.constant 0 : index
    %c0_75 = arith.constant 0 : index
    %132 = vector.load %arg6[%c0_73, %c0_74, %c0_75] : memref<1x8x256xf32, #tpu.memory_space<vmem>>, vector<1x8x256xf32>
    %133 = vector.shape_cast %132 : vector<1x8x256xf32> to vector<8x256xf32>
    %134 = vector.shape_cast %131 : vector<8x256xf32> to vector<1x8x256xf32>
    tpu.vector_store %arg6[%c0_73, %c0_74, %c0_75], %134 {strides = array<i32>} : memref<1x8x256xf32, #tpu.memory_space<vmem>>, vector<1x8x256xf32>,
    return
  }
  func.func @transform_0(%arg0: i32) -> (i32, i32, i32) {
    %c0_i32 = arith.constant 0 : i32
    %c0_i32_0 = arith.constant 0 : i32
    %c0_i32_1 = arith.constant 0 : i32
    return %arg0, %c0_i32, %c0_i32_0 : i32, i32, i32
  }
  func.func @transform_1(%arg0: i32) -> (i32, i32) {
    %c0_i32 = arith.constant 0 : i32
    %c0_i32_0 = arith.constant 0 : i32
    %c0_i32_1 = arith.constant 0 : i32
    return %c0_i32, %c0_i32_0 : i32, i32
  }
  func.func @transform_2(%arg0: i32) -> (i32, i32) {
    %c0_i32 = arith.constant 0 : i32
    %c0_i32_0 = arith.constant 0 : i32
    %c0_i32_1 = arith.constant 0 : i32
    return %c0_i32, %c0_i32_0 : i32, i32
  }
  func.func @transform_3(%arg0: i32) -> (i32, i32) {
    %c0_i32 = arith.constant 0 : i32
    %c0_i32_0 = arith.constant 0 : i32
    %c0_i32_1 = arith.constant 0 : i32
    return %c0_i32, %c0_i32_0 : i32, i32
  }
  func.func @transform_4(%arg0: i32) -> (i32, i32) {
    %c0_i32 = arith.constant 0 : i32
    %c0_i32_0 = arith.constant 0 : i32
    %c0_i32_1 = arith.constant 0 : i32
    return %c0_i32, %c0_i32_0 : i32, i32
  }
  func.func @transform_5(%arg0: i32) -> (i32, i32, i32) {
    %c0_i32 = arith.constant 0 : i32
    %c0_i32_0 = arith.constant 0 : i32
    %c0_i32_1 = arith.constant 0 : i32
    return %arg0, %c0_i32, %c0_i32_0 : i32, i32, i32
  }
}

</mosaic_0001>

<llo_original>
// kernel: tpu_custom_call.1
$region0: #{tpu_custom_call.1}
  #allocation0 [shape = 'u32[]', space=smem, size = 0x4, offset = 0x4, fixed_abs, tag = 'smem constant byte address 0x4 - core index']
  #allocation1 [shape = 'u32[144,128]{1,0:T(1,128)}', space=vmem, size = 0x12000, scoped, tag = 'internal scratch']
  #allocation2 [shape = 'f32[72,256]{1,0:T(8,128)}', space=vmem, size = 0x12000, scoped, tag = 'scratch operand']
  %s0 = inlined_call_operand.hbm [shape: f32[2,8,256], index: 0, kind: input, shape index: {}]
  %s1 = inlined_call_operand.vmem [shape: f32[8,72], index: 1, kind: input, shape index: {}]
  %s2 = inlined_call_operand.vmem [shape: f32[8,1], index: 2, kind: input, shape index: {}]
  %s3 = inlined_call_operand.vmem [shape: f32[8,72], index: 3, kind: input, shape index: {}]
  %s4 = inlined_call_operand.vmem [shape: f32[8,1], index: 4, kind: input, shape index: {}]
  %s5 = inlined_call_operand.hbm [shape: f32[2,8,256], index: 5, kind: output, shape index: {}]
  %s6 = sld [smem:[#allocation0]]
  $region57: #{tpu_custom_call.1} parent=0
    _
  %s8 = ssub.s32 1, %s6
  %s9 = scalar_select 0, %s8, %s6
  $region1: #{tpu_custom_call.1} parent=0
    #allocation3 [shape = 'u8[16384]{0}', space=vmem, size = 0x4000, scoped, tag = 'input window, operand 0']
    #allocation4 [shape = 's32[2]{0}', space=sflag, size = 0x8, scoped, tag = 'scoped memory for tpu_custom_call.1']
    #allocation5 [shape = 's32[2]{0}', space=sflag, size = 0x8, scoped, tag = 'scoped memory for tpu_custom_call.1']
    #allocation6 [shape = 'u8[16384]{0}', space=vmem, size = 0x4000, scoped, tag = 'output window, operand 0']
    %10 = vsyncpa [#allocation4], 0
    %s11 = scalar_lea.sflag [#allocation4], 1
    %12 = vsyncpa %s11, 0
    %13 = vsyncpa [#allocation5], 0
    %s14 = scalar_lea.sflag [#allocation5], 1
    %15 = vsyncpa %s14, 0
    loop: start=0, step=1, limit=4
    $region2: #{tpu_custom_call.1} parent=1 // loop_pre_header
      _
    $region3: #{tpu_custom_call.1} parent=1 // loop_header
      %s17 = sphi 0, %s21
      %p18 = scmp.ge.s32.totalorder %s17, 4
      %s27 = sphi 0, %s29
      %s30 = sphi 0, %s27
      %s31 = sphi 0, %s30
      %s47 = sphi 0, %s31
      %s51 = sphi 0, %s51
      %s53 = sphi 0, %s51
      %s54 = sphi 0, %s53
      %s68 = sphi 0, %s54
      %s72 = sphi 0, %s72
      %s74 = sphi 0, %s72
      %s75 = sphi 0, %s74
      %s89 = sphi 0, %s75
      %s93 = sphi 0, %s93
      %s95 = sphi 0, %s93
      %s96 = sphi 0, %s95
      %s110 = sphi 0, %s96
      %s114 = sphi 0, %s114
      %s116 = sphi 0, %s114
      %s117 = sphi 0, %s116
      %s131 = sphi 0, %s117
      %s137 = sphi 0, %s139
      %s140 = sphi 0, %s137
      %s141 = sphi 0, %s140
      %s157 = sphi 0, %s141
    $region4: #{tpu_custom_call.1} parent=1 // loop_header_branch
      %20 = sbr.rel (%p18) target = $region8
    $region5: #{tpu_custom_call.1} parent=1 // loop_body
      %s22 = ssub.s32 %s17, 1
      %s23 = ssub.s32 %s17, 2
      %s24 = sadd.s32 %s17, 1
      %s25 = ssub.s32 %s17, %s24
      %p26 = scmp.eq.s32.totalorder %s25, 0
      %s28 = sadd.s32 %s27, 1
      %s29 = scalar_select %p26, %s27, %s28
      %p32 = pneg %p26
      %p33 = scmp.eq.s32.totalorder %s17, 1
      %p34 = por %p32, %p33
      %p35 = scmp.ne.s32.totalorder %s27, %s30
      %p36 = scmp.eq.s32.totalorder %s17, 0
      %p37 = por %p35, %p36
      %p38 = scmp.ne.s32.totalorder %s27, %s30
      %p39 = scmp.eq.s32.totalorder %s22, 1
      %p40 = por %p38, %p39
      %p41 = scmp.ne.s32.totalorder %s30, %s31
      %p42 = scmp.eq.s32.totalorder %s22, 0
      %p43 = por %p41, %p42
      %p44 = scmp.ne.s32.totalorder %s30, %s31
      %p45 = scmp.eq.s32.totalorder %s23, 1
      %p46 = por %p44, %p45
      %p48 = scmp.ne.s32.totalorder %s31, %s47
      %p49 = scmp.eq.s32.totalorder %s23, 0
      %p50 = por %p48, %p49
      %s52 = sadd.s32 %s51, 1
      %p55 = scmp.eq.s32.totalorder %s17, 1
      %p56 = scmp.ne.s32.totalorder %s51, %s53
      %p57 = scmp.eq.s32.totalorder %s17, 0
      %p58 = por %p56, %p57
      %p59 = scmp.ne.s32.totalorder %s51, %s53
      %p60 = scmp.eq.s32.totalorder %s22, 1
      %p61 = por %p59, %p60
      %p62 = scmp.ne.s32.totalorder %s53, %s54
      %p63 = scmp.eq.s32.totalorder %s22, 0
      %p64 = por %p62, %p63
      %p65 = scmp.ne.s32.totalorder %s53, %s54
      %p66 = scmp.eq.s32.totalorder %s23, 1
      %p67 = por %p65, %p66
      %p69 = scmp.ne.s32.totalorder %s54, %s68
      %p70 = scmp.eq.s32.totalorder %s23, 0
      %p71 = por %p69, %p70
      %s73 = sadd.s32 %s72, 1
      %p76 = scmp.eq.s32.totalorder %s17, 1
      %p77 = scmp.ne.s32.totalorder %s72, %s74
      %p78 = scmp.eq.s32.totalorder %s17, 0
      %p79 = por %p77, %p78
      %p80 = scmp.ne.s32.totalorder %s72, %s74
      %p81 = scmp.eq.s32.totalorder %s22, 1
      %p82 = por %p80, %p81
      %p83 = scmp.ne.s32.totalorder %s74, %s75
      %p84 = scmp.eq.s32.totalorder %s22, 0
      %p85 = por %p83, %p84
      %p86 = scmp.ne.s32.totalorder %s74, %s75
      %p87 = scmp.eq.s32.totalorder %s23, 1
      %p88 = por %p86, %p87
      %p90 = scmp.ne.s32.totalorder %s75, %s89
      %p91 = scmp.eq.s32.totalorder %s23, 0
      %p92 = por %p90, %p91
      %s94 = sadd.s32 %s93, 1
      %p97 = scmp.eq.s32.totalorder %s17, 1
      %p98 = scmp.ne.s32.totalorder %s93, %s95
      %p99 = scmp.eq.s32.totalorder %s17, 0
      %p100 = por %p98, %p99
      %p101 = scmp.ne.s32.totalorder %s93, %s95
      %p102 = scmp.eq.s32.totalorder %s22, 1
      %p103 = por %p101, %p102
      %p104 = scmp.ne.s32.totalorder %s95, %s96
      %p105 = scmp.eq.s32.totalorder %s22, 0
      %p106 = por %p104, %p105
      %p107 = scmp.ne.s32.totalorder %s95, %s96
      %p108 = scmp.eq.s32.totalorder %s23, 1
      %p109 = por %p107, %p108
      %p111 = scmp.ne.s32.totalorder %s96, %s110
      %p112 = scmp.eq.s32.totalorder %s23, 0
      %p113 = por %p111, %p112
      %s115 = sadd.s32 %s114, 1
      %p118 = scmp.eq.s32.totalorder %s17, 1
      %p119 = scmp.ne.s32.totalorder %s114, %s116
      %p120 = scmp.eq.s32.totalorder %s17, 0
      %p121 = por %p119, %p120
      %p122 = scmp.ne.s32.totalorder %s114, %s116
      %p123 = scmp.eq.s32.totalorder %s22, 1
      %p124 = por %p122, %p123
      %p125 = scmp.ne.s32.totalorder %s116, %s117
      %p126 = scmp.eq.s32.totalorder %s22, 0
      %p127 = por %p125, %p126
      %p128 = scmp.ne.s32.totalorder %s116, %s117
      %p129 = scmp.eq.s32.totalorder %s23, 1
      %p130 = por %p128, %p129
      %p132 = scmp.ne.s32.totalorder %s117, %s131
      %p133 = scmp.eq.s32.totalorder %s23, 0
      %p134 = por %p132, %p133
      %s135 = ssub.s32 %s17, %s24
      %p136 = scmp.eq.s32.totalorder %s135, 0
      %s138 = sadd.s32 %s137, 1
      %s139 = scalar_select %p136, %s137, %s138
      %p142 = pneg %p136
      %p143 = scmp.eq.s32.totalorder %s17, 1
      %p144 = por %p142, %p143
      %p145 = scmp.ne.s32.totalorder %s137, %s140
      %p146 = scmp.eq.s32.totalorder %s17, 0
      %p147 = por %p145, %p146
      %p148 = scmp.ne.s32.totalorder %s137, %s140
      %p149 = scmp.eq.s32.totalorder %s22, 1
      %p150 = por %p148, %p149
      %p151 = scmp.ne.s32.totalorder %s140, %s141
      %p152 = scmp.eq.s32.totalorder %s22, 0
      %p153 = por %p151, %p152
      %p154 = scmp.ne.s32.totalorder %s140, %s141
      %p155 = scmp.eq.s32.totalorder %s23, 1
      %p156 = por %p154, %p155
      %p158 = scmp.ne.s32.totalorder %s141, %s157
      %p159 = scmp.eq.s32.totalorder %s23, 0
      %p160 = por %p158, %p159
      %p161 = scmp.le.s32.totalorder 1, %s17
      %p162 = scmp.lt.s32.totalorder %s17, 3
      %p163 = pnand %p161, %p162
      %p164 = pneg %p163
      // Predicated region
      $region9: #{tpu_custom_call.1} parent=5 // pred_check
        _
      $region10: #{tpu_custom_call.1} parent=5 // pred_check_branch
        %166 = sbr.rel (%p163) target = $region12
      $region11: #{tpu_custom_call.1} parent=5 // pred_region
        %s167 = ssub.s32 %s17, 1
        // Predicated region
        $region13: #{tpu_custom_call.1} parent=11 // pred_check
          %p168 = pneg %p64
        $region14: #{tpu_custom_call.1} parent=11 // pred_check_branch
          %170 = sbr.rel (%p168) target = $region16
        $region15: #{tpu_custom_call.1} parent=11 // pred_region
          _
        $region16: #{tpu_custom_call.1} parent=11 // pred_fallthru
          _
        // Predicated region
        $region17: #{tpu_custom_call.1} parent=11 // pred_check
          %p171 = pneg %p85
        $region18: #{tpu_custom_call.1} parent=11 // pred_check_branch
          %173 = sbr.rel (%p171) target = $region20
        $region19: #{tpu_custom_call.1} parent=11 // pred_region
          _
        $region20: #{tpu_custom_call.1} parent=11 // pred_fallthru
          _
        // Predicated region
        $region21: #{tpu_custom_call.1} parent=11 // pred_check
          %p174 = pneg %p106
        $region22: #{tpu_custom_call.1} parent=11 // pred_check_branch
          %176 = sbr.rel (%p174) target = $region24
        $region23: #{tpu_custom_call.1} parent=11 // pred_region
          _
        $region24: #{tpu_custom_call.1} parent=11 // pred_fallthru
          _
        // Predicated region
        $region25: #{tpu_custom_call.1} parent=11 // pred_check
          %p177 = pneg %p127
        $region26: #{tpu_custom_call.1} parent=11 // pred_check_branch
          %179 = sbr.rel (%p177) target = $region28
        $region27: #{tpu_custom_call.1} parent=11 // pred_region
          _
        $region28: #{tpu_custom_call.1} parent=11 // pred_fallthru
          _
      $region12: #{tpu_custom_call.1} parent=5 // pred_fallthru
        _
      %p180 = scmp.lt.s32.totalorder %s17, 2
      // Predicated region
      $region29: #{tpu_custom_call.1} parent=5 // pred_check
        %p181 = pneg %p180
      $region30: #{tpu_custom_call.1} parent=5 // pred_check_branch
        %183 = sbr.rel (%p181) target = $region32
      $region31: #{tpu_custom_call.1} parent=5 // pred_region
        // Predicated region
        $region33: #{tpu_custom_call.1} parent=31 // pred_check
          %p184 = pneg %p37
        $region34: #{tpu_custom_call.1} parent=31 // pred_check_branch
          %186 = sbr.rel (%p184) target = $region36
        $region35: #{tpu_custom_call.1} parent=31 // pred_region
          %s187 = sand.u32 %s27, 1
          %s188 = scalar_lea.sflag [#allocation4], %s187
          %s189 = sand.u32 %s27, 1
          %s190 = smul.addr %s189, 16
          %s191 = scalar_lea.vmem [#allocation3], %s190
          %s193 = ssub.s32 256, 256
          %194 = vsyncadd %s188, %s193
          %s195 = smul.addr %s17, 2
          %s196 = smul.addr %s195, 128
          %s197 = scalar_lea.hbm %s0, %s196
          %s199 = sshll.u32 %s191, 4
          %s200 = int_to_ptr.vmem [resolvable:$true] %s199
          %202 = dma.hbm_to_vmem [thread:$0]  %s197, 256, %s200, %s188
        $region36: #{tpu_custom_call.1} parent=31 // pred_fallthru
          _
      $region32: #{tpu_custom_call.1} parent=5 // pred_fallthru
        _
      %p203 = scmp.le.s32.totalorder 1, %s17
      %p204 = scmp.lt.s32.totalorder %s17, 3
      %p205 = pnand %p203, %p204
      %p206 = pneg %p205
      // Predicated region
      $region37: #{tpu_custom_call.1} parent=5 // pred_check
        _
      $region38: #{tpu_custom_call.1} parent=5 // pred_check_branch
        %208 = sbr.rel (%p205) target = $region40
      $region39: #{tpu_custom_call.1} parent=5 // pred_region
        %s209 = ssub.s32 %s17, 1
        %s210 = sand.u32 %s30, 1
        %s211 = scalar_lea.sflag [#allocation4], %s210
        %s212 = sand.u32 %s30, 1
        %s213 = smul.addr %s212, 16
        %s214 = scalar_lea.vmem [#allocation3], %s213
        // Predicated region
        $region41: #{tpu_custom_call.1} parent=39 // pred_check
          %p215 = pneg %p43
        $region42: #{tpu_custom_call.1} parent=39 // pred_check_branch
          %217 = sbr.rel (%p215) target = $region44
        $region43: #{tpu_custom_call.1} parent=39 // pred_region
          %218 = dma.done %s211, 256
        $region44: #{tpu_custom_call.1} parent=39 // pred_fallthru
          _
        %s219 = sand.u32 %s30, 1
        %s220 = scalar_lea.sflag [#allocation4], %s219
        %s221 = sand.u32 %s30, 1
        %s222 = smul.addr %s221, 16
        %s223 = scalar_lea.vmem [#allocation3], %s222
        %p224 = pneg %p43
        %p225 = pneg %p40
        %p226 = pneg %p64
        %p227 = pneg %p61
        %p228 = pneg %p85
        %p229 = pneg %p82
        %p230 = pneg %p106
        %p231 = pneg %p103
        %p232 = pneg %p127
        %p233 = pneg %p124
        %p234 = pneg %p153
        %p235 = pneg %p150
        %s236 = sand.u32 %s140, 1
        %s237 = scalar_lea.sflag [#allocation5], %s236
        %s238 = sand.u32 %s140, 1
        %s239 = smul.addr %s238, 16
        %s240 = scalar_lea.vmem [#allocation6], %s239
        %v241 = vlaneseq
        %v242 = vand.u32 %v241, 127
        %v243 = vadd.s32 %v242, 128
        %v244 = vand.u32 %v242, 15
        %v245 = vand.u32 %v243, 15
        %vm246 = vcmp.ge.s32.totalorder %v244, 1
        %vm247 = vcmp.ge.s32.totalorder %v245, 1
        %vm248 = vcmp.le.s32.totalorder %v244, 14
        %vm249 = vcmp.le.s32.totalorder %v245, 14
        %vm250 = vcmp.ge.s32.totalorder %v242, 16
        %vm251 = vcmp.ge.s32.totalorder %v243, 16
        %vm252 = vcmp.lt.s32.totalorder %v242, 240
        %vm253 = vcmp.lt.s32.totalorder %v243, 240
        %vm254 = vmand %vm250, %vm246
        %vm255 = vmand %vm251, %vm247
        %vm256 = vmand %vm250, %vm248
        %vm257 = vmand %vm251, %vm249
        %vm258 = vmand %vm252, %vm246
        %vm259 = vmand %vm253, %vm247
        %vm260 = vmand %vm252, %vm248
        %vm261 = vmand %vm253, %vm249
        %v262 = vld [vmem:[%s214] sm:$0xff]
        %v263 = vld [vmem:[%s214 + $0x8] sm:$0xff]
        %264 = vrot.lane.b32.xlu0 %v262, 17
        %v265 = vpop.permute.xlu0 %264
        %266 = vrot.lane.b32.xlu0 %v263, 17
        %v267 = vpop.permute.xlu0 %266
        %vm268 = vcmp.lt.s32.totalorder %v242, 17
        %v269 = vsel %vm268, %v265, %v267
        %v270 = vsel %vm268, %v267, %v265
        %v271 = vsel %vm254, 1, 0
        %v272 = vsel %vm255, 1, 0
        %vm273 = vcmp.eq.s32.totalorder %v271, 1
        %vm274 = vcmp.eq.s32.totalorder %v272, 1
        %v275 = vsel %vm273, %v270, 0.0
        %v276 = vsel %vm274, %v269, 0.0
        %277 = vst [vmem:[#allocation2] sm:$0xff] %v275
        %278 = vst [vmem:[#allocation2 + $0x8] sm:$0xff] %v276
        %279 = vrot.lane.b32.xlu0 %v262, 16
        %v280 = vpop.permute.xlu0 %279
        %281 = vrot.lane.b32.xlu0 %v263, 16
        %v282 = vpop.permute.xlu0 %281
        %vm283 = vcmp.lt.s32.totalorder %v242, 16
        %v284 = vsel %vm283, %v280, %v282
        %v285 = vsel %vm283, %v282, %v280
        %v286 = vsel %vm250, 1, 0
        %v287 = vsel %vm251, 1, 0
        %vm288 = vcmp.eq.s32.totalorder %v286, 1
        %vm289 = vcmp.eq.s32.totalorder %v287, 1
        %v290 = vsel %vm288, %v285, 0.0
        %v291 = vsel %vm289, %v284, 0.0
        %292 = vst [vmem:[#allocation2 + $0x10] sm:$0xff] %v290
        %293 = vst [vmem:[#allocation2 + $0x18] sm:$0xff] %v291
        %294 = vrot.lane.b32.xlu0 %v262, 15
        %v295 = vpop.permute.xlu0 %294
        %296 = vrot.lane.b32.xlu0 %v263, 15
        %v297 = vpop.permute.xlu0 %296
        %vm298 = vcmp.lt.s32.totalorder %v242, 15
        %v299 = vsel %vm298, %v295, %v297
        %v300 = vsel %vm298, %v297, %v295
        %v301 = vsel %vm256, 1, 0
        %v302 = vsel %vm257, 1, 0
        %vm303 = vcmp.eq.s32.totalorder %v301, 1
        %vm304 = vcmp.eq.s32.totalorder %v302, 1
        %v305 = vsel %vm303, %v300, 0.0
        %v306 = vsel %vm304, %v299, 0.0
        %307 = vst [vmem:[#allocation2 + $0x20] sm:$0xff] %v305
        %308 = vst [vmem:[#allocation2 + $0x28] sm:$0xff] %v306
        %309 = vrot.lane.b32.xlu0 %v262, 1
        %v310 = vpop.permute.xlu0 %309
        %311 = vrot.lane.b32.xlu0 %v263, 1
        %v312 = vpop.permute.xlu0 %311
        %vm313 = vcmp.lt.s32.totalorder %v242, 1
        %v314 = vsel %vm313, %v310, %v312
        %v315 = vsel %vm313, %v312, %v310
        %v316 = vsel %vm246, 1, 0
        %v317 = vsel %vm247, 1, 0
        %vm318 = vcmp.eq.s32.totalorder %v316, 1
        %vm319 = vcmp.eq.s32.totalorder %v317, 1
        %v320 = vsel %vm318, %v315, 0.0
        %v321 = vsel %vm319, %v314, 0.0
        %322 = vst [vmem:[#allocation2 + $0x30] sm:$0xff] %v320
        %323 = vst [vmem:[#allocation2 + $0x38] sm:$0xff] %v321
        %324 = vst [vmem:[#allocation2 + $0x40] sm:$0xff] %v262
        %325 = vst [vmem:[#allocation2 + $0x48] sm:$0xff] %v263
        %326 = vrot.lane.b32.xlu0 %v262, 127
        %v327 = vpop.permute.xlu0 %326
        %328 = vrot.lane.b32.xlu0 %v263, 127
        %v329 = vpop.permute.xlu0 %328
        %vm330 = vcmp.lt.s32.totalorder %v242, 127
        %v331 = vsel %vm330, %v327, %v329
        %v332 = vsel %vm330, %v329, %v327
        %v333 = vsel %vm248, 1, 0
        %v334 = vsel %vm249, 1, 0
        %vm335 = vcmp.eq.s32.totalorder %v333, 1
        %vm336 = vcmp.eq.s32.totalorder %v334, 1
        %v337 = vsel %vm335, %v331, 0.0
        %v338 = vsel %vm336, %v332, 0.0
        %339 = vst [vmem:[#allocation2 + $0x50] sm:$0xff] %v337
        %340 = vst [vmem:[#allocation2 + $0x58] sm:$0xff] %v338
        %341 = vrot.lane.b32.xlu0 %v262, 113
        %v342 = vpop.permute.xlu0 %341
        %343 = vrot.lane.b32.xlu0 %v263, 113
        %v344 = vpop.permute.xlu0 %343
        %vm345 = vcmp.lt.s32.totalorder %v242, 113
        %v346 = vsel %vm345, %v342, %v344
        %v347 = vsel %vm345, %v344, %v342
        %v348 = vsel %vm258, 1, 0
        %v349 = vsel %vm259, 1, 0
        %vm350 = vcmp.eq.s32.totalorder %v348, 1
        %vm351 = vcmp.eq.s32.totalorder %v349, 1
        %v352 = vsel %vm350, %v346, 0.0
        %v353 = vsel %vm351, %v347, 0.0
        %354 = vst [vmem:[#allocation2 + $0x60] sm:$0xff] %v352
        %355 = vst [vmem:[#allocation2 + $0x68] sm:$0xff] %v353
        %356 = vrot.lane.b32.xlu0 %v262, 112
        %v357 = vpop.permute.xlu0 %356
        %358 = vrot.lane.b32.xlu0 %v263, 112
        %v359 = vpop.permute.xlu0 %358
        %vm360 = vcmp.lt.s32.totalorder %v242, 112
        %v361 = vsel %vm360, %v357, %v359
        %v362 = vsel %vm360, %v359, %v357
        %v363 = vsel %vm252, 1, 0
        %v364 = vsel %vm253, 1, 0
        %vm365 = vcmp.eq.s32.totalorder %v363, 1
        %vm366 = vcmp.eq.s32.totalorder %v364, 1
        %v367 = vsel %vm365, %v361, 0.0
        %v368 = vsel %vm366, %v362, 0.0
        %369 = vst [vmem:[#allocation2 + $0x70] sm:$0xff] %v367
        %370 = vst [vmem:[#allocation2 + $0x78] sm:$0xff] %v368
        %371 = vrot.lane.b32.xlu0 %v262, 111
        %v372 = vpop.permute.xlu0 %371
        %373 = vrot.lane.b32.xlu0 %v263, 111
        %v374 = vpop.permute.xlu0 %373
        %vm375 = vcmp.lt.s32.totalorder %v242, 111
        %v376 = vsel %vm375, %v372, %v374
        %v377 = vsel %vm375, %v374, %v372
        %v378 = vsel %vm260, 1, 0
        %v379 = vsel %vm261, 1, 0
        %vm380 = vcmp.eq.s32.totalorder %v378, 1
        %vm381 = vcmp.eq.s32.totalorder %v379, 1
        %v382 = vsel %vm380, %v376, 0.0
        %v383 = vsel %vm381, %v377, 0.0
        %384 = vst [vmem:[#allocation2 + $0x80] sm:$0xff] %v382
        %385 = vst [vmem:[#allocation2 + $0x88] sm:$0xff] %v383
        %v386 = vld [vmem:[%s1] sm:$0xff]
        %v387 = vld [vmem:[#allocation2] sm:$0xff]
        %v388 = vld [vmem:[#allocation2 + $0x8] sm:$0xff]
        %v389 = vld [vmem:[#allocation2 + $0x10] sm:$0xff]
        %v390 = vld [vmem:[#allocation2 + $0x18] sm:$0xff]
        %v391 = vld [vmem:[#allocation2 + $0x20] sm:$0xff]
        %v392 = vld [vmem:[#allocation2 + $0x28] sm:$0xff]
        %v393 = vld [vmem:[#allocation2 + $0x30] sm:$0xff]
        %v394 = vld [vmem:[#allocation2 + $0x38] sm:$0xff]
        %v395 = vld [vmem:[#allocation2 + $0x40] sm:$0xff]
        %v396 = vld [vmem:[#allocation2 + $0x48] sm:$0xff]
        %v397 = vld [vmem:[#allocation2 + $0x50] sm:$0xff]
        %v398 = vld [vmem:[#allocation2 + $0x58] sm:$0xff]
        %v399 = vld [vmem:[#allocation2 + $0x60] sm:$0xff]
        %v400 = vld [vmem:[#allocation2 + $0x68] sm:$0xff]
        %v401 = vld [vmem:[#allocation2 + $0x70] sm:$0xff]
        %v402 = vld [vmem:[#allocation2 + $0x78] sm:$0xff]
        %v403 = vld [vmem:[#allocation2 + $0x80] sm:$0xff]
        %v404 = vld [vmem:[#allocation2 + $0x88] sm:$0xff]
        %v405 = vld [vmem:[%s2] sm:$0xff]
        %407 = vset.pattern.permute.xlu0 0
        %408 = vperm.xlu0 %407, %v405
        %v409 = vpop.permute.xlu0 %408
        %vm411 = vcmask 588800
        %v413 = vsel %vm411, %v386, 0
        %415 = vmatprep.subr.mxu0 0.0
        %416 = vmatpush1.msra.mxu0 0.0
        %417 = vmatprep.subr.mxu0 0.0
        %418 = vmatpush1.msra.mxu0 0.0
        %419 = vmatprep.subr.mxu0 0.0
        %420 = vmatpush1.msra.mxu0 0.0
        %421 = vmatprep.subr.mxu0 0.0
        %422 = vmatpush1.msra.mxu0 0.0
        %423 = vmatprep.subr.mxu0 0.0
        %424 = vmatpush1.msra.mxu0 0.0
        %425 = vmatprep.subr.mxu0 0.0
        %426 = vmatpush1.msra.mxu0 0.0
        %427 = vmatprep.subr.mxu0 0.0
        %428 = vmatpush1.msra.mxu0 0.0
        %429 = vmatprep.subr.mxu0 %v404
        %430 = vmatpush1.msra.mxu0 %v403
        %431 = vmatprep.subr.mxu0 %v402
        %432 = vmatpush1.msra.mxu0 %v401
        %433 = vmatprep.subr.mxu0 %v400
        %434 = vmatpush1.msra.mxu0 %v399
        %435 = vmatprep.subr.mxu0 %v398
        %436 = vmatpush1.msra.mxu0 %v397
        %437 = vmatprep.subr.mxu0 %v396
        %438 = vmatpush1.msra.mxu0 %v395
        %439 = vmatprep.subr.mxu0 %v394
        %440 = vmatpush1.msra.mxu0 %v393
        %441 = vmatprep.subr.mxu0 %v392
        %442 = vmatpush1.msra.mxu0 %v391
        %443 = vmatprep.subr.mxu0 %v390
        %444 = vmatpush1.msra.mxu0 %v389
        %445 = vmatprep.subr.mxu0 %v388
        %446 = vmatpush1.msra.mxu0 %v387
        %447 = vmatprep.subr.mxu0 0.0
        %448 = vmatpush2.msra.mxu0 0.0
        %449 = vmatprep.subr.mxu0 0.0
        %450 = vmatpush2.msra.mxu0 0.0
        %451 = vmatprep.subr.mxu0 0.0
        %452 = vmatpush2.msra.mxu0 0.0
        %453 = vmatprep.subr.mxu0 0.0
        %454 = vmatpush2.msra.mxu0 0.0
        %455 = vmatprep.subr.mxu0 0.0
        %456 = vmatpush2.msra.mxu0 0.0
        %457 = vmatprep.subr.mxu0 0.0
        %458 = vmatpush2.msra.mxu0 0.0
        %459 = vmatprep.subr.mxu0 0.0
        %460 = vmatpush2.msra.mxu0 0.0
        %461 = vmatprep.subr.mxu0 0.0
        %462 = vmatpush2.msra.mxu0 0.0
        %463 = vmatprep.subr.mxu0 0.0
        %464 = vmatpush2.msra.mxu0 0.0
        %465 = vmatprep.subr.mxu0 0.0
        %466 = vmatpush2.msra.mxu0 0.0
        %467 = vmatprep.subr.mxu0 0.0
        %468 = vmatpush2.msra.mxu0 0.0
        %469 = vmatprep.subr.mxu0 0.0
        %470 = vmatpush2.msra.mxu0 0.0
        %471 = vmatprep.subr.mxu0 0.0
        %472 = vmatpush2.msra.mxu0 0.0
        %473 = vmatprep.subr.mxu0 0.0
        %474 = vmatpush2.msra.mxu0 0.0
        %475 = vmatprep.subr.mxu0 0.0
        %476 = vmatpush2.msra.mxu0 0.0
        %477 = vmatprep.subr.mxu0 0.0
        %478 = vmatpush2.msra.mxu0 0.0
        %479 = vmatprep.mubr.f32.mxu0 0.0
        %480 = vmatmul.mubr.f32.gmra.mxu0 %v413
        %v481 = vpop.f32.mrf.mxu0
        %v482 = vadd.f32 %v409, %v481
        %v483 = vpop.f32.mrf.mxu0
        %v484 = vadd.f32 %v409, %v483
        %485 = vdwg.mxu0
        %v486 = vmax.f32 %v482, 0.0
        %v487 = vmax.f32 %v484, 0.0
        %488 = vrot.lane.b32.xlu0 %v486, 17
        %v489 = vpop.permute.xlu0 %488
        %490 = vrot.lane.b32.xlu0 %v487, 17
        %v491 = vpop.permute.xlu0 %490
        %v492 = vsel %vm268, %v489, %v491
        %v493 = vsel %vm268, %v491, %v489
        %v494 = vsel %vm273, %v493, 0.0
        %v495 = vsel %vm274, %v492, 0.0
        %496 = vst [vmem:[#allocation2] sm:$0xff] %v494
        %497 = vst [vmem:[#allocation2 + $0x8] sm:$0xff] %v495
        %498 = vrot.lane.b32.xlu0 %v486, 16
        %v499 = vpop.permute.xlu0 %498
        %500 = vrot.lane.b32.xlu0 %v487, 16
        %v501 = vpop.permute.xlu0 %500
        %v502 = vsel %vm283, %v499, %v501
        %v503 = vsel %vm283, %v501, %v499
        %v504 = vsel %vm288, %v503, 0.0
        %v505 = vsel %vm289, %v502, 0.0
        %506 = vst [vmem:[#allocation2 + $0x10] sm:$0xff] %v504
        %507 = vst [vmem:[#allocation2 + $0x18] sm:$0xff] %v505
        %508 = vrot.lane.b32.xlu0 %v486, 15
        %v509 = vpop.permute.xlu0 %508
        %510 = vrot.lane.b32.xlu0 %v487, 15
        %v511 = vpop.permute.xlu0 %510
        %v512 = vsel %vm298, %v509, %v511
        %v513 = vsel %vm298, %v511, %v509
        %v514 = vsel %vm303, %v513, 0.0
        %v515 = vsel %vm304, %v512, 0.0
        %516 = vst [vmem:[#allocation2 + $0x20] sm:$0xff] %v514
        %517 = vst [vmem:[#allocation2 + $0x28] sm:$0xff] %v515
        %518 = vrot.lane.b32.xlu0 %v486, 1
        %v519 = vpop.permute.xlu0 %518
        %520 = vrot.lane.b32.xlu0 %v487, 1
        %v521 = vpop.permute.xlu0 %520
        %v522 = vsel %vm313, %v519, %v521
        %v523 = vsel %vm313, %v521, %v519
        %v524 = vsel %vm318, %v523, 0.0
        %v525 = vsel %vm319, %v522, 0.0
        %526 = vst [vmem:[#allocation2 + $0x30] sm:$0xff] %v524
        %527 = vst [vmem:[#allocation2 + $0x38] sm:$0xff] %v525
        %528 = vst [vmem:[#allocation2 + $0x40] sm:$0xff] %v486
        %529 = vst [vmem:[#allocation2 + $0x48] sm:$0xff] %v487
        %530 = vrot.lane.b32.xlu0 %v486, 127
        %v531 = vpop.permute.xlu0 %530
        %532 = vrot.lane.b32.xlu0 %v487, 127
        %v533 = vpop.permute.xlu0 %532
        %v534 = vsel %vm330, %v531, %v533
        %v535 = vsel %vm330, %v533, %v531
        %v536 = vsel %vm335, %v534, 0.0
        %v537 = vsel %vm336, %v535, 0.0
        %538 = vst [vmem:[#allocation2 + $0x50] sm:$0xff] %v536
        %539 = vst [vmem:[#allocation2 + $0x58] sm:$0xff] %v537
        %540 = vrot.lane.b32.xlu0 %v486, 113
        %v541 = vpop.permute.xlu0 %540
        %542 = vrot.lane.b32.xlu0 %v487, 113
        %v543 = vpop.permute.xlu0 %542
        %v544 = vsel %vm345, %v541, %v543
        %v545 = vsel %vm345, %v543, %v541
        %v546 = vsel %vm350, %v544, 0.0
        %v547 = vsel %vm351, %v545, 0.0
        %548 = vst [vmem:[#allocation2 + $0x60] sm:$0xff] %v546
        %549 = vst [vmem:[#allocation2 + $0x68] sm:$0xff] %v547
        %550 = vrot.lane.b32.xlu0 %v486, 112
        %v551 = vpop.permute.xlu0 %550
        %552 = vrot.lane.b32.xlu0 %v487, 112
        %v553 = vpop.permute.xlu0 %552
        %v554 = vsel %vm360, %v551, %v553
        %v555 = vsel %vm360, %v553, %v551
        %v556 = vsel %vm365, %v554, 0.0
        %v557 = vsel %vm366, %v555, 0.0
        %558 = vst [vmem:[#allocation2 + $0x70] sm:$0xff] %v556
        %559 = vst [vmem:[#allocation2 + $0x78] sm:$0xff] %v557
        %560 = vrot.lane.b32.xlu0 %v486, 111
        %v561 = vpop.permute.xlu0 %560
        %562 = vrot.lane.b32.xlu0 %v487, 111
        %v563 = vpop.permute.xlu0 %562
        %v564 = vsel %vm375, %v561, %v563
        %v565 = vsel %vm375, %v563, %v561
        %v566 = vsel %vm380, %v564, 0.0
        %v567 = vsel %vm381, %v565, 0.0
        %568 = vst [vmem:[#allocation2 + $0x80] sm:$0xff] %v566
        %569 = vst [vmem:[#allocation2 + $0x88] sm:$0xff] %v567
        %v570 = vld [vmem:[%s3] sm:$0xff]
        %v571 = vld [vmem:[#allocation2] sm:$0xff]
        %v572 = vld [vmem:[#allocation2 + $0x8] sm:$0xff]
        %v573 = vld [vmem:[#allocation2 + $0x10] sm:$0xff]
        %v574 = vld [vmem:[#allocation2 + $0x18] sm:$0xff]
        %v575 = vld [vmem:[#allocation2 + $0x20] sm:$0xff]
        %v576 = vld [vmem:[#allocation2 + $0x28] sm:$0xff]
        %v577 = vld [vmem:[#allocation2 + $0x30] sm:$0xff]
        %v578 = vld [vmem:[#allocation2 + $0x38] sm:$0xff]
        %v579 = vld [vmem:[#allocation2 + $0x40] sm:$0xff]
        %v580 = vld [vmem:[#allocation2 + $0x48] sm:$0xff]
        %v581 = vld [vmem:[#allocation2 + $0x50] sm:$0xff]
        %v582 = vld [vmem:[#allocation2 + $0x58] sm:$0xff]
        %v583 = vld [vmem:[#allocation2 + $0x60] sm:$0xff]
        %v584 = vld [vmem:[#allocation2 + $0x68] sm:$0xff]
        %v585 = vld [vmem:[#allocation2 + $0x70] sm:$0xff]
        %v586 = vld [vmem:[#allocation2 + $0x78] sm:$0xff]
        %v587 = vld [vmem:[#allocation2 + $0x80] sm:$0xff]
        %v588 = vld [vmem:[#allocation2 + $0x88] sm:$0xff]
        %v589 = vld [vmem:[%s4] sm:$0xff]
        %591 = vset.pattern.permute.xlu0 0
        %592 = vperm.xlu0 %591, %v589
        %v593 = vpop.permute.xlu0 %592
        %v596 = vsel %vm411, %v570, 0
        %598 = vmatprep.subr.mxu0 0.0
        %599 = vmatpush1.msra.mxu0 0.0
        %600 = vmatprep.subr.mxu0 0.0
        %601 = vmatpush1.msra.mxu0 0.0
        %602 = vmatprep.subr.mxu0 0.0
        %603 = vmatpush1.msra.mxu0 0.0
        %604 = vmatprep.subr.mxu0 0.0
        %605 = vmatpush1.msra.mxu0 0.0
        %606 = vmatprep.subr.mxu0 0.0
        %607 = vmatpush1.msra.mxu0 0.0
        %608 = vmatprep.subr.mxu0 0.0
        %609 = vmatpush1.msra.mxu0 0.0
        %610 = vmatprep.subr.mxu0 0.0
        %611 = vmatpush1.msra.mxu0 0.0
        %612 = vmatprep.subr.mxu0 %v588
        %613 = vmatpush1.msra.mxu0 %v587
        %614 = vmatprep.subr.mxu0 %v586
        %615 = vmatpush1.msra.mxu0 %v585
        %616 = vmatprep.subr.mxu0 %v584
        %617 = vmatpush1.msra.mxu0 %v583
        %618 = vmatprep.subr.mxu0 %v582
        %619 = vmatpush1.msra.mxu0 %v581
        %620 = vmatprep.subr.mxu0 %v580
        %621 = vmatpush1.msra.mxu0 %v579
        %622 = vmatprep.subr.mxu0 %v578
        %623 = vmatpush1.msra.mxu0 %v577
        %624 = vmatprep.subr.mxu0 %v576
        %625 = vmatpush1.msra.mxu0 %v575
        %626 = vmatprep.subr.mxu0 %v574
        %627 = vmatpush1.msra.mxu0 %v573
        %628 = vmatprep.subr.mxu0 %v572
        %629 = vmatpush1.msra.mxu0 %v571
        %630 = vmatprep.subr.mxu0 0.0
        %631 = vmatpush2.msra.mxu0 0.0
        %632 = vmatprep.subr.mxu0 0.0
        %633 = vmatpush2.msra.mxu0 0.0
        %634 = vmatprep.subr.mxu0 0.0
        %635 = vmatpush2.msra.mxu0 0.0
        %636 = vmatprep.subr.mxu0 0.0
        %637 = vmatpush2.msra.mxu0 0.0
        %638 = vmatprep.subr.mxu0 0.0
        %639 = vmatpush2.msra.mxu0 0.0
        %640 = vmatprep.subr.mxu0 0.0
        %641 = vmatpush2.msra.mxu0 0.0
        %642 = vmatprep.subr.mxu0 0.0
        %643 = vmatpush2.msra.mxu0 0.0
        %644 = vmatprep.subr.mxu0 0.0
        %645 = vmatpush2.msra.mxu0 0.0
        %646 = vmatprep.subr.mxu0 0.0
        %647 = vmatpush2.msra.mxu0 0.0
        %648 = vmatprep.subr.mxu0 0.0
        %649 = vmatpush2.msra.mxu0 0.0
        %650 = vmatprep.subr.mxu0 0.0
        %651 = vmatpush2.msra.mxu0 0.0
        %652 = vmatprep.subr.mxu0 0.0
        %653 = vmatpush2.msra.mxu0 0.0
        %654 = vmatprep.subr.mxu0 0.0
        %655 = vmatpush2.msra.mxu0 0.0
        %656 = vmatprep.subr.mxu0 0.0
        %657 = vmatpush2.msra.mxu0 0.0
        %658 = vmatprep.subr.mxu0 0.0
        %659 = vmatpush2.msra.mxu0 0.0
        %660 = vmatprep.subr.mxu0 0.0
        %661 = vmatpush2.msra.mxu0 0.0
        %662 = vmatprep.mubr.f32.mxu0 0.0
        %663 = vmatmul.mubr.f32.gmra.mxu0 %v596
        %v664 = vpop.f32.mrf.mxu0
        %v665 = vadd.f32 %v593, %v664
        %v666 = vpop.f32.mrf.mxu0
        %v667 = vadd.f32 %v593, %v666
        %668 = vdwg.mxu0
        %v669 = vadd.f32 %v665, %v262
        %v670 = vadd.f32 %v667, %v263
        %v671 = vmax.f32 %v669, 0.0
        %v672 = vmax.f32 %v670, 0.0
        %673 = vst [vmem:[%s240] sm:$0xff] %v671
        %674 = vst [vmem:[%s240 + $0x8] sm:$0xff] %v672
        %s675 = sand.u32 %s140, 1
        %s676 = scalar_lea.sflag [#allocation5], %s675
        %s677 = sand.u32 %s140, 1
        %s678 = smul.addr %s677, 16
        %s679 = scalar_lea.vmem [#allocation6], %s678
        // Predicated region
        $region45: #{tpu_custom_call.1} parent=39 // pred_check
          %p680 = pneg %p150
        $region46: #{tpu_custom_call.1} parent=39 // pred_check_branch
          %682 = sbr.rel (%p680) target = $region48
        $region47: #{tpu_custom_call.1} parent=39 // pred_region
          %s684 = ssub.s32 256, 256
          %685 = vsyncadd %s676, %s684
          %s686 = smul.addr %s22, 2
          %s687 = smul.addr %s686, 128
          %s688 = scalar_lea.hbm %s5, %s687
          %s690 = sshll.u32 %s679, 4
          %s691 = int_to_ptr.vmem [resolvable:$true] %s690
          %693 = dma.vmem_to_hbm [thread:$0]  %s691, 256, %s688, %s676
        $region48: #{tpu_custom_call.1} parent=39 // pred_fallthru
          _
      $region40: #{tpu_custom_call.1} parent=5 // pred_fallthru
        _
      %p694 = scmp.le.s32.totalorder 2, %s17
      // Predicated region
      $region49: #{tpu_custom_call.1} parent=5 // pred_check
        %p695 = pneg %p694
      $region50: #{tpu_custom_call.1} parent=5 // pred_check_branch
        %697 = sbr.rel (%p695) target = $region52
      $region51: #{tpu_custom_call.1} parent=5 // pred_region
        %s698 = ssub.s32 %s17, 2
        // Predicated region
        $region53: #{tpu_custom_call.1} parent=51 // pred_check
          %p699 = pneg %p156
        $region54: #{tpu_custom_call.1} parent=51 // pred_check_branch
          %701 = sbr.rel (%p699) target = $region56
        $region55: #{tpu_custom_call.1} parent=51 // pred_region
          %s702 = sand.u32 %s141, 1
          %s703 = scalar_lea.sflag [#allocation5], %s702
          %s704 = sand.u32 %s141, 1
          %s705 = smul.addr %s704, 16
          %s706 = scalar_lea.vmem [#allocation6], %s705
          %707 = dma.done %s703, 256
        $region56: #{tpu_custom_call.1} parent=51 // pred_fallthru
          _
      $region52: #{tpu_custom_call.1} parent=5 // pred_fallthru
        _
    $region6: #{tpu_custom_call.1} parent=1 // loop_footer
      %s21 = sadd.s32 1, %s17
    $region7: #{tpu_custom_call.1} parent=1 // loop_footer_branch
      %16 = sbr.rel target = $region3
    $region8: #{tpu_custom_call.1} parent=1 // loop_exit
      _
    %708 = vsyncpa [#allocation4], 1
    %s709 = scalar_lea.sflag [#allocation4], 1
    %710 = vsyncpa %s709, 1
    %711 = vsyncpa [#allocation5], 1
    %s712 = scalar_lea.sflag [#allocation5], 1
    %713 = vsyncpa %s712, 1

</llo_original>
